<compile_context>
chip_gen: v7x
topology: tpu7x:2x2x1
jax: 0.10.0
libtpu: 0.0.40
codegen_flags: <defaults>
</compile_context>

<pallas_src>
import functools

import jax
import jax.numpy as jnp
from jax import lax
from jax.experimental import pallas as pl
from jax.experimental.pallas import tpu as pltpu

# fmix32-style mixing constants, expressed as signed int32.
_MIX0 = -1640531535  # 0x9E3779B1
_MIX1 = -2048144789  # 0x85EBCA6B
_MIX2 = -1028477387  # 0xC2B2AE35


def _srl(v, k):
    """Logical right shift for int32 values (mask off sign-extension bits)."""
    return (v >> k) & ((1 << (32 - k)) - 1)


def _dropout_train_kernel(seed_ref, x_ref, o_ref, *, threshold, inv_keep,
                          block_elems):
    rows, lanes = x_ref.shape
    # Global element index of every entry in this block (unique across grid).
    row_id = lax.broadcasted_iota(jnp.int32, (rows, lanes), 0)
    col_id = lax.broadcasted_iota(jnp.int32, (rows, lanes), 1)
    idx = row_id * lanes + col_id + pl.program_id(0) * block_elems

    # Counter-based hash: seed ^ index -> well-mixed 32-bit value (wraps mod 2^32).
    h = idx ^ seed_ref[0]
    h = h * _MIX0
    h = h ^ _srl(h, 16)
    h = h * _MIX1
    h = h ^ _srl(h, 13)
    h = h * _MIX2
    h = h ^ _srl(h, 16)
    r = h & 0x7FFFFFFF                       # uniform in [0, 2^31)

    keep = r >= threshold                    # P(keep) ~= 1 - p
    x = x_ref[...]
    o_ref[...] = jnp.where(keep, x * inv_keep, jnp.zeros_like(x))


def custom_dropout(x, p=0.5, training=True, seed=0):
    """Elementwise dropout matching the PyTorch CustomDropout module."""
    if not training:
        # Eval mode is a single scalar multiply; XLA already emits this optimally.
        return x * (1.0 - p)

    orig_shape = x.shape
    orig_dtype = x.dtype
    total = x.size
    assert total % 128 == 0, "flattened size must be a multiple of 128 lanes"

    # Widest lane-dense layout (unmasked full-width stores).
    lanes = 128
    for cand in (2048, 1024, 512, 256, 128):
        if total % cand == 0:
            lanes = cand
            break
    rows = total // lanes
    x2 = x.reshape(rows, lanes)

    # ~1 MiB blocks: small enough for v5e's 16 MiB scoped VMEM with
    # double-buffered in+out, big enough to amortize per-step overhead.
    itemsize = jnp.dtype(orig_dtype).itemsize
    target_rows = max(1, (1 << 20) // (lanes * itemsize))
    if rows <= target_rows:
        block_rows = rows                       # whole (small) array, one block
    else:
        block_rows = rows                       # fallback: single block
        for d in range(min(target_rows, rows), 0, -1):
            if rows % d == 0 and d % 8 == 0:    # keep (8, 128) tiling legal
                block_rows = d
                break
    num_blocks = rows // block_rows

    threshold = min(int(round(p * (1 << 31))), (1 << 31) - 1)
    inv_keep = 1.0 / (1.0 - p)

    seed_arr = jnp.array([seed], dtype=jnp.int32)
    kernel = functools.partial(
        _dropout_train_kernel,
        threshold=threshold,
        inv_keep=inv_keep,
        block_elems=block_rows * lanes,
    )

    out = pl.pallas_call(
        kernel,
        out_shape=jax.ShapeDtypeStruct((rows, lanes), orig_dtype),
        grid_spec=pltpu.PrefetchScalarGridSpec(
            num_scalar_prefetch=1,
            grid=(num_blocks,),
            in_specs=[pl.BlockSpec((block_rows, lanes), lambda i, seed: (i, 0))],
            out_specs=pl.BlockSpec((block_rows, lanes), lambda i, seed: (i, 0)),
        ),
        compiler_params=pltpu.CompilerParams(
            dimension_semantics=("parallel",),   # embarrassingly parallel grid
        ),
        cost_estimate=pl.CostEstimate(
            flops=2 * total,
            transcendentals=0,
            bytes_accessed=2 * total * itemsize,
        ),
    )(seed_arr, x2)

    return out.reshape(orig_shape)


if __name__ == "__main__":
    key = jax.random.PRNGKey(0)
    x = jax.random.normal(key, (2, 4, 16, 16), dtype=jnp.float32)  # NCHW

    p = 0.5

    # Training-mode forward (PyTorch modules default to training=True).
    y_train = jax.block_until_ready(custom_dropout(x, p=p, training=True, seed=0))

    # Eval-mode forward.
    y_eval = jax.block_until_ready(custom_dropout(x, p=p, training=False))

    # Sanity checks:
    #  - training output entries are either 0 or x/(1-p)
    #  - roughly (1-p) of the entries are kept
    #  - eval output is exactly x*(1-p)
    scaled = x / (1.0 - p)
    ok_train = bool(
        jnp.all(
            jnp.isclose(y_train, 0.0, atol=1e-6)
            | jnp.isclose(y_train, scaled, atol=1e-5, rtol=1e-5)
        )
    )
    keep_frac = float(jnp.mean((jnp.abs(y_train) > 0).astype(jnp.float32)))
    ok_frac = 0.2 < keep_frac < 0.8
    ok_eval = bool(jnp.allclose(y_eval, x * (1.0 - p), atol=1e-6))

    if ok_train and ok_eval and ok_frac:
        print("KERNEL_OK")
    else:
        raise SystemExit(
            f"dropout kernel mismatch (train={ok_train}, eval={ok_eval}, "
            f"keep_frac={keep_frac:.3f})"
        )
</pallas_src>

<mosaic_0001>
module attributes {stable_mosaic.version = 11 : i64} {
  func.func @_dropout_train_kernel(%arg0: i32, %arg1: memref<1xi32, #tpu.memory_space<smem>>, %arg2: memref<1x2048xf32, #tpu.memory_space<vmem>>, %arg3: memref<1x2048xf32, #tpu.memory_space<vmem>>) attributes {dimension_semantics = [#tpu.dimension_semantics<parallel>], iteration_bounds = array<i64: 1>, scalar_prefetch = 1 : i64, scratch_operands = 0 : i64, tpu.core_type = #tpu.core_type<tc>, window_params = [{transform_indices = @transform_0, window_bounds = array<i64: 1, 2048>}, {transform_indices = @transform_1, window_bounds = array<i64: 1, 2048>}]} {
    %0 = tpu.iota {dimensions = array<i32: 0>} : vector<1x2048xi32>
    %1 = tpu.iota {dimensions = array<i32: 1>} : vector<1x2048xi32>
    %c2048_i32 = arith.constant 2048 : i32
    %2 = vector.broadcast %c2048_i32 : i32 to vector<1x2048xi32>
    %3 = arith.muli %0, %2 : vector<1x2048xi32>
    %4 = arith.addi %3, %1 : vector<1x2048xi32>
    %c2048_i32_0 = arith.constant 2048 : i32
    %5 = arith.muli %arg0, %c2048_i32_0 : i32
    %6 = vector.broadcast %5 : i32 to vector<1x2048xi32>
    %7 = arith.addi %4, %6 : vector<1x2048xi32>
    %c0 = arith.constant 0 : index
    %8 = memref.load %arg1[%c0] : memref<1xi32, #tpu.memory_space<smem>>
    %9 = vector.broadcast %8 : i32 to vector<1x2048xi32>
    %10 = arith.xori %7, %9 : vector<1x2048xi32>
    %c-1640531535_i32 = arith.constant -1640531535 : i32
    %11 = vector.broadcast %c-1640531535_i32 : i32 to vector<1x2048xi32>
    %12 = arith.muli %10, %11 : vector<1x2048xi32>
    %c16_i32 = arith.constant 16 : i32
    %13 = vector.broadcast %c16_i32 : i32 to vector<1x2048xi32>
    %14 = arith.shrsi %12, %13 : vector<1x2048xi32>
    %c65535_i32 = arith.constant 65535 : i32
    %15 = vector.broadcast %c65535_i32 : i32 to vector<1x2048xi32>
    %16 = arith.andi %14, %15 : vector<1x2048xi32>
    %17 = arith.xori %12, %16 : vector<1x2048xi32>
    %c-2048144789_i32 = arith.constant -2048144789 : i32
    %18 = vector.broadcast %c-2048144789_i32 : i32 to vector<1x2048xi32>
    %19 = arith.muli %17, %18 : vector<1x2048xi32>
    %c13_i32 = arith.constant 13 : i32
    %20 = vector.broadcast %c13_i32 : i32 to vector<1x2048xi32>
    %21 = arith.shrsi %19, %20 : vector<1x2048xi32>
    %c524287_i32 = arith.constant 524287 : i32
    %22 = vector.broadcast %c524287_i32 : i32 to vector<1x2048xi32>
    %23 = arith.andi %21, %22 : vector<1x2048xi32>
    %24 = arith.xori %19, %23 : vector<1x2048xi32>
    %c-1028477387_i32 = arith.constant -1028477387 : i32
    %25 = vector.broadcast %c-1028477387_i32 : i32 to vector<1x2048xi32>
    %26 = arith.muli %24, %25 : vector<1x2048xi32>
    %c16_i32_1 = arith.constant 16 : i32
    %27 = vector.broadcast %c16_i32_1 : i32 to vector<1x2048xi32>
    %28 = arith.shrsi %26, %27 : vector<1x2048xi32>
    %c65535_i32_2 = arith.constant 65535 : i32
    %29 = vector.broadcast %c65535_i32_2 : i32 to vector<1x2048xi32>
    %30 = arith.andi %28, %29 : vector<1x2048xi32>
    %31 = arith.xori %26, %30 : vector<1x2048xi32>
    %c2147483647_i32 = arith.constant 2147483647 : i32
    %32 = vector.broadcast %c2147483647_i32 : i32 to vector<1x2048xi32>
    %33 = arith.andi %31, %32 : vector<1x2048xi32>
    %c1073741824_i32 = arith.constant 1073741824 : i32
    %34 = vector.broadcast %c1073741824_i32 : i32 to vector<1x2048xi32>
    %35 = arith.cmpi sge, %33, %34 : vector<1x2048xi32>
    %c0_3 = arith.constant 0 : index
    %c0_4 = arith.constant 0 : index
    %36 = vector.load %arg2[%c0_3, %c0_4] : memref<1x2048xf32, #tpu.memory_space<vmem>>, vector<1x2048xf32>
    %cst = arith.constant 2.000000e+00 : f32
    %37 = vector.broadcast %cst : f32 to vector<1x2048xf32>
    %38 = arith.mulf %36, %37 : vector<1x2048xf32>
    %cst_5 = arith.constant 0.000000e+00 : f32
    %39 = vector.broadcast %cst_5 : f32 to vector<1x2048xf32>
    %40 = arith.select %35, %38, %39 : vector<1x2048xi1>, vector<1x2048xf32>
    %c0_6 = arith.constant 0 : index
    %c0_7 = arith.constant 0 : index
    %41 = vector.load %arg3[%c0_6, %c0_7] : memref<1x2048xf32, #tpu.memory_space<vmem>>, vector<1x2048xf32>
    tpu.vector_store %arg3[%c0_6, %c0_7], %40 {strides = array<i32>} : memref<1x2048xf32, #tpu.memory_space<vmem>>, vector<1x2048xf32>,
    return
  }
  func.func @transform_0(%arg0: i32, %arg1: memref<1xi32, #tpu.memory_space<smem>>) -> (i32, i32) {
    %c0_i32 = arith.constant 0 : i32
    %c0_i32_0 = arith.constant 0 : i32
    return %arg0, %c0_i32 : i32, i32
  }
  func.func @transform_1(%arg0: i32, %arg1: memref<1xi32, #tpu.memory_space<smem>>) -> (i32, i32) {
    %c0_i32 = arith.constant 0 : i32
    %c0_i32_0 = arith.constant 0 : i32
    return %arg0, %c0_i32 : i32, i32
  }
}

</mosaic_0001>

<llo_original>
// kernel: tpu_custom_call.1
$region0: #{tpu_custom_call.1}
  #allocation0 [shape = 'u32[]', space=smem, size = 0x4, offset = 0x4, fixed_abs, tag = 'smem constant byte address 0x4 - core index']
  #allocation1 [shape = 'u32[144,128]{1,0:T(1,128)}', space=vmem, size = 0x12000, scoped, tag = 'internal scratch']
  #allocation2 [shape = 's32[1]{0}', space=sflag, size = 0x4, scoped, tag = 'scoped memory for tpu_custom_call.1']
  #allocation3 [shape = 's32[1]{0:T(128)S(6)}', space=smem, size = 0x200, scoped, tag = 'prefetched SMEM operand 0']
  %s0 = inlined_call_operand.<no memory space> [shape: s32[1], index: 0, kind: input, shape index: {}]
  %s1 = inlined_call_operand.hbm [shape: f32[1,2048], index: 1, kind: input, shape index: {}]
  %s2 = inlined_call_operand.hbm [shape: f32[1,2048], index: 2, kind: output, shape index: {}]
  %s3 = sld [smem:[#allocation0]]
  $region18: #{tpu_custom_call.1} parent=0
    _
  %s5 = ssub.s32 1, %s3
  %s6 = scalar_select 0, %s5, %s3
  %7 = sst [smem:[#allocation3]] %s0
  $region1: #{tpu_custom_call.1} parent=0
    #allocation4 [shape = 'u8[8192]{0}', space=vmem, size = 0x2000, scoped, tag = 'input window, operand 1, single buffered']
    #allocation5 [shape = 's32[1]{0}', space=sflag, size = 0x4, scoped, tag = 'scoped memory for tpu_custom_call.1']
    #allocation6 [shape = 's32[1]{0}', space=sflag, size = 0x4, scoped, tag = 'scoped memory for tpu_custom_call.1']
    #allocation7 [shape = 'u8[8192]{0}', space=vmem, size = 0x2000, scoped, tag = 'output window, operand 0, single buffered']
    %8 = vsyncpa [#allocation5], 0
    %9 = vsyncpa [#allocation6], 0
    // Predicated region
    $region2: #{tpu_custom_call.1} parent=1 // pred_check
      _
    $region3: #{tpu_custom_call.1} parent=1 // pred_check_branch
      %11 = sbr.rel (0) target = $region5
    $region4: #{tpu_custom_call.1} parent=1 // pred_region
      %s13 = ssub.s32 256, 256
      %14 = vsyncadd [#allocation5], %s13
      %s16 = sshll.u32 [#allocation4], 4
      %s17 = int_to_ptr.vmem [resolvable:$true] %s16
      %19 = dma.hbm_to_vmem [thread:$0]  %s1, 256, %s17, [#allocation5]
    $region5: #{tpu_custom_call.1} parent=1 // pred_fallthru
      _
    // Predicated region
    $region6: #{tpu_custom_call.1} parent=1 // pred_check
      _
    $region7: #{tpu_custom_call.1} parent=1 // pred_check_branch
      %21 = sbr.rel (0) target = $region9
    $region8: #{tpu_custom_call.1} parent=1 // pred_region
      %22 = dma.done [#allocation5], 256
    $region9: #{tpu_custom_call.1} parent=1 // pred_fallthru
      _
    %v23 = vlaneseq
    %v24 = vshrl.u32 %v23, 7
    %v25 = vlaneseq
    %v26 = vand.u32 %v25, 127
    %v27 = vadd.s32 %v26, 128
    %v28 = vadd.s32 %v26, 256
    %v29 = vadd.s32 %v26, 384
    %v30 = vadd.s32 %v26, 512
    %v31 = vadd.s32 %v26, 640
    %v32 = vadd.s32 %v26, 768
    %v33 = vadd.s32 %v26, 896
    %v34 = vadd.s32 %v26, 1024
    %v35 = vadd.s32 %v26, 1152
    %v36 = vadd.s32 %v26, 1280
    %v37 = vadd.s32 %v26, 1408
    %v38 = vadd.s32 %v26, 1536
    %v39 = vadd.s32 %v26, 1664
    %v40 = vadd.s32 %v26, 1792
    %v41 = vadd.s32 %v26, 1920
    %v42 = vmul.u32 %v24, 2048
    %v43 = vadd.s32 %v42, %v26
    %v44 = vadd.s32 %v42, %v27
    %v45 = vadd.s32 %v42, %v28
    %v46 = vadd.s32 %v42, %v29
    %v47 = vadd.s32 %v42, %v30
    %v48 = vadd.s32 %v42, %v31
    %v49 = vadd.s32 %v42, %v32
    %v50 = vadd.s32 %v42, %v33
    %v51 = vadd.s32 %v42, %v34
    %v52 = vadd.s32 %v42, %v35
    %v53 = vadd.s32 %v42, %v36
    %v54 = vadd.s32 %v42, %v37
    %v55 = vadd.s32 %v42, %v38
    %v56 = vadd.s32 %v42, %v39
    %v57 = vadd.s32 %v42, %v40
    %v58 = vadd.s32 %v42, %v41
    %s59 = smul.u32 0, 2048
    %v60 = vstv %s59
    %v61 = vadd.s32 %v43, %v60
    %v62 = vadd.s32 %v44, %v60
    %v63 = vadd.s32 %v45, %v60
    %v64 = vadd.s32 %v46, %v60
    %v65 = vadd.s32 %v47, %v60
    %v66 = vadd.s32 %v48, %v60
    %v67 = vadd.s32 %v49, %v60
    %v68 = vadd.s32 %v50, %v60
    %v69 = vadd.s32 %v51, %v60
    %v70 = vadd.s32 %v52, %v60
    %v71 = vadd.s32 %v53, %v60
    %v72 = vadd.s32 %v54, %v60
    %v73 = vadd.s32 %v55, %v60
    %v74 = vadd.s32 %v56, %v60
    %v75 = vadd.s32 %v57, %v60
    %v76 = vadd.s32 %v58, %v60
    %s77 = sld [smem:[#allocation3]]
    %v78 = vstv %s77
    %v79 = vxor.u32 %v61, %v78
    %v80 = vxor.u32 %v62, %v78
    %v81 = vxor.u32 %v63, %v78
    %v82 = vxor.u32 %v64, %v78
    %v83 = vxor.u32 %v65, %v78
    %v84 = vxor.u32 %v66, %v78
    %v85 = vxor.u32 %v67, %v78
    %v86 = vxor.u32 %v68, %v78
    %v87 = vxor.u32 %v69, %v78
    %v88 = vxor.u32 %v70, %v78
    %v89 = vxor.u32 %v71, %v78
    %v90 = vxor.u32 %v72, %v78
    %v91 = vxor.u32 %v73, %v78
    %v92 = vxor.u32 %v74, %v78
    %v93 = vxor.u32 %v75, %v78
    %v94 = vxor.u32 %v76, %v78
    %v95 = vmul.u32 %v79, 2654435761
    %v96 = vmul.u32 %v80, 2654435761
    %v97 = vmul.u32 %v81, 2654435761
    %v98 = vmul.u32 %v82, 2654435761
    %v99 = vmul.u32 %v83, 2654435761
    %v100 = vmul.u32 %v84, 2654435761
    %v101 = vmul.u32 %v85, 2654435761
    %v102 = vmul.u32 %v86, 2654435761
    %v103 = vmul.u32 %v87, 2654435761
    %v104 = vmul.u32 %v88, 2654435761
    %v105 = vmul.u32 %v89, 2654435761
    %v106 = vmul.u32 %v90, 2654435761
    %v107 = vmul.u32 %v91, 2654435761
    %v108 = vmul.u32 %v92, 2654435761
    %v109 = vmul.u32 %v93, 2654435761
    %v110 = vmul.u32 %v94, 2654435761
    %v111 = vshra.s32 %v95, 16
    %v112 = vshra.s32 %v96, 16
    %v113 = vshra.s32 %v97, 16
    %v114 = vshra.s32 %v98, 16
    %v115 = vshra.s32 %v99, 16
    %v116 = vshra.s32 %v100, 16
    %v117 = vshra.s32 %v101, 16
    %v118 = vshra.s32 %v102, 16
    %v119 = vshra.s32 %v103, 16
    %v120 = vshra.s32 %v104, 16
    %v121 = vshra.s32 %v105, 16
    %v122 = vshra.s32 %v106, 16
    %v123 = vshra.s32 %v107, 16
    %v124 = vshra.s32 %v108, 16
    %v125 = vshra.s32 %v109, 16
    %v126 = vshra.s32 %v110, 16
    %v127 = vand.u32 %v111, 65535
    %v128 = vand.u32 %v112, 65535
    %v129 = vand.u32 %v113, 65535
    %v130 = vand.u32 %v114, 65535
    %v131 = vand.u32 %v115, 65535
    %v132 = vand.u32 %v116, 65535
    %v133 = vand.u32 %v117, 65535
    %v134 = vand.u32 %v118, 65535
    %v135 = vand.u32 %v119, 65535
    %v136 = vand.u32 %v120, 65535
    %v137 = vand.u32 %v121, 65535
    %v138 = vand.u32 %v122, 65535
    %v139 = vand.u32 %v123, 65535
    %v140 = vand.u32 %v124, 65535
    %v141 = vand.u32 %v125, 65535
    %v142 = vand.u32 %v126, 65535
    %v143 = vxor.u32 %v95, %v127
    %v144 = vxor.u32 %v96, %v128
    %v145 = vxor.u32 %v97, %v129
    %v146 = vxor.u32 %v98, %v130
    %v147 = vxor.u32 %v99, %v131
    %v148 = vxor.u32 %v100, %v132
    %v149 = vxor.u32 %v101, %v133
    %v150 = vxor.u32 %v102, %v134
    %v151 = vxor.u32 %v103, %v135
    %v152 = vxor.u32 %v104, %v136
    %v153 = vxor.u32 %v105, %v137
    %v154 = vxor.u32 %v106, %v138
    %v155 = vxor.u32 %v107, %v139
    %v156 = vxor.u32 %v108, %v140
    %v157 = vxor.u32 %v109, %v141
    %v158 = vxor.u32 %v110, %v142
    %v159 = vmul.u32 %v143, 2246822507
    %v160 = vmul.u32 %v144, 2246822507
    %v161 = vmul.u32 %v145, 2246822507
    %v162 = vmul.u32 %v146, 2246822507
    %v163 = vmul.u32 %v147, 2246822507
    %v164 = vmul.u32 %v148, 2246822507
    %v165 = vmul.u32 %v149, 2246822507
    %v166 = vmul.u32 %v150, 2246822507
    %v167 = vmul.u32 %v151, 2246822507
    %v168 = vmul.u32 %v152, 2246822507
    %v169 = vmul.u32 %v153, 2246822507
    %v170 = vmul.u32 %v154, 2246822507
    %v171 = vmul.u32 %v155, 2246822507
    %v172 = vmul.u32 %v156, 2246822507
    %v173 = vmul.u32 %v157, 2246822507
    %v174 = vmul.u32 %v158, 2246822507
    %v175 = vshra.s32 %v159, 13
    %v176 = vshra.s32 %v160, 13
    %v177 = vshra.s32 %v161, 13
    %v178 = vshra.s32 %v162, 13
    %v179 = vshra.s32 %v163, 13
    %v180 = vshra.s32 %v164, 13
    %v181 = vshra.s32 %v165, 13
    %v182 = vshra.s32 %v166, 13
    %v183 = vshra.s32 %v167, 13
    %v184 = vshra.s32 %v168, 13
    %v185 = vshra.s32 %v169, 13
    %v186 = vshra.s32 %v170, 13
    %v187 = vshra.s32 %v171, 13
    %v188 = vshra.s32 %v172, 13
    %v189 = vshra.s32 %v173, 13
    %v190 = vshra.s32 %v174, 13
    %v191 = vand.u32 %v175, 524287
    %v192 = vand.u32 %v176, 524287
    %v193 = vand.u32 %v177, 524287
    %v194 = vand.u32 %v178, 524287
    %v195 = vand.u32 %v179, 524287
    %v196 = vand.u32 %v180, 524287
    %v197 = vand.u32 %v181, 524287
    %v198 = vand.u32 %v182, 524287
    %v199 = vand.u32 %v183, 524287
    %v200 = vand.u32 %v184, 524287
    %v201 = vand.u32 %v185, 524287
    %v202 = vand.u32 %v186, 524287
    %v203 = vand.u32 %v187, 524287
    %v204 = vand.u32 %v188, 524287
    %v205 = vand.u32 %v189, 524287
    %v206 = vand.u32 %v190, 524287
    %v207 = vxor.u32 %v159, %v191
    %v208 = vxor.u32 %v160, %v192
    %v209 = vxor.u32 %v161, %v193
    %v210 = vxor.u32 %v162, %v194
    %v211 = vxor.u32 %v163, %v195
    %v212 = vxor.u32 %v164, %v196
    %v213 = vxor.u32 %v165, %v197
    %v214 = vxor.u32 %v166, %v198
    %v215 = vxor.u32 %v167, %v199
    %v216 = vxor.u32 %v168, %v200
    %v217 = vxor.u32 %v169, %v201
    %v218 = vxor.u32 %v170, %v202
    %v219 = vxor.u32 %v171, %v203
    %v220 = vxor.u32 %v172, %v204
    %v221 = vxor.u32 %v173, %v205
    %v222 = vxor.u32 %v174, %v206
    %v223 = vmul.u32 %v207, 3266489909
    %v224 = vmul.u32 %v208, 3266489909
    %v225 = vmul.u32 %v209, 3266489909
    %v226 = vmul.u32 %v210, 3266489909
    %v227 = vmul.u32 %v211, 3266489909
    %v228 = vmul.u32 %v212, 3266489909
    %v229 = vmul.u32 %v213, 3266489909
    %v230 = vmul.u32 %v214, 3266489909
    %v231 = vmul.u32 %v215, 3266489909
    %v232 = vmul.u32 %v216, 3266489909
    %v233 = vmul.u32 %v217, 3266489909
    %v234 = vmul.u32 %v218, 3266489909
    %v235 = vmul.u32 %v219, 3266489909
    %v236 = vmul.u32 %v220, 3266489909
    %v237 = vmul.u32 %v221, 3266489909
    %v238 = vmul.u32 %v222, 3266489909
    %v239 = vshra.s32 %v223, 16
    %v240 = vshra.s32 %v224, 16
    %v241 = vshra.s32 %v225, 16
    %v242 = vshra.s32 %v226, 16
    %v243 = vshra.s32 %v227, 16
    %v244 = vshra.s32 %v228, 16
    %v245 = vshra.s32 %v229, 16
    %v246 = vshra.s32 %v230, 16
    %v247 = vshra.s32 %v231, 16
    %v248 = vshra.s32 %v232, 16
    %v249 = vshra.s32 %v233, 16
    %v250 = vshra.s32 %v234, 16
    %v251 = vshra.s32 %v235, 16
    %v252 = vshra.s32 %v236, 16
    %v253 = vshra.s32 %v237, 16
    %v254 = vshra.s32 %v238, 16
    %v255 = vand.u32 %v239, 65535
    %v256 = vand.u32 %v240, 65535
    %v257 = vand.u32 %v241, 65535
    %v258 = vand.u32 %v242, 65535
    %v259 = vand.u32 %v243, 65535
    %v260 = vand.u32 %v244, 65535
    %v261 = vand.u32 %v245, 65535
    %v262 = vand.u32 %v246, 65535
    %v263 = vand.u32 %v247, 65535
    %v264 = vand.u32 %v248, 65535
    %v265 = vand.u32 %v249, 65535
    %v266 = vand.u32 %v250, 65535
    %v267 = vand.u32 %v251, 65535
    %v268 = vand.u32 %v252, 65535
    %v269 = vand.u32 %v253, 65535
    %v270 = vand.u32 %v254, 65535
    %v271 = vxor.u32 %v223, %v255
    %v272 = vxor.u32 %v224, %v256
    %v273 = vxor.u32 %v225, %v257
    %v274 = vxor.u32 %v226, %v258
    %v275 = vxor.u32 %v227, %v259
    %v276 = vxor.u32 %v228, %v260
    %v277 = vxor.u32 %v229, %v261
    %v278 = vxor.u32 %v230, %v262
    %v279 = vxor.u32 %v231, %v263
    %v280 = vxor.u32 %v232, %v264
    %v281 = vxor.u32 %v233, %v265
    %v282 = vxor.u32 %v234, %v266
    %v283 = vxor.u32 %v235, %v267
    %v284 = vxor.u32 %v236, %v268
    %v285 = vxor.u32 %v237, %v269
    %v286 = vxor.u32 %v238, %v270
    %v287 = vand.u32 %v271, 2147483647
    %v288 = vand.u32 %v272, 2147483647
    %v289 = vand.u32 %v273, 2147483647
    %v290 = vand.u32 %v274, 2147483647
    %v291 = vand.u32 %v275, 2147483647
    %v292 = vand.u32 %v276, 2147483647
    %v293 = vand.u32 %v277, 2147483647
    %v294 = vand.u32 %v278, 2147483647
    %v295 = vand.u32 %v279, 2147483647
    %v296 = vand.u32 %v280, 2147483647
    %v297 = vand.u32 %v281, 2147483647
    %v298 = vand.u32 %v282, 2147483647
    %v299 = vand.u32 %v283, 2147483647
    %v300 = vand.u32 %v284, 2147483647
    %v301 = vand.u32 %v285, 2147483647
    %v302 = vand.u32 %v286, 2147483647
    %vm303 = vcmp.ge.s32.totalorder %v287, 1073741824
    %vm304 = vcmp.ge.s32.totalorder %v288, 1073741824
    %vm305 = vcmp.ge.s32.totalorder %v289, 1073741824
    %vm306 = vcmp.ge.s32.totalorder %v290, 1073741824
    %vm307 = vcmp.ge.s32.totalorder %v291, 1073741824
    %vm308 = vcmp.ge.s32.totalorder %v292, 1073741824
    %vm309 = vcmp.ge.s32.totalorder %v293, 1073741824
    %vm310 = vcmp.ge.s32.totalorder %v294, 1073741824
    %vm311 = vcmp.ge.s32.totalorder %v295, 1073741824
    %vm312 = vcmp.ge.s32.totalorder %v296, 1073741824
    %vm313 = vcmp.ge.s32.totalorder %v297, 1073741824
    %vm314 = vcmp.ge.s32.totalorder %v298, 1073741824
    %vm315 = vcmp.ge.s32.totalorder %v299, 1073741824
    %vm316 = vcmp.ge.s32.totalorder %v300, 1073741824
    %vm317 = vcmp.ge.s32.totalorder %v301, 1073741824
    %vm318 = vcmp.ge.s32.totalorder %v302, 1073741824
    %v319 = vld [vmem:[#allocation4] sm:$0xff]
    %v320 = vld [vmem:[#allocation4 + $0x8] sm:$0xff]
    %v321 = vmul.f32 %v319, 2.0
    %v322 = vmul.f32 %v320, 2.0
    %v325 = vlaneseq
    %v326 = vshrl.u32 %v325, 7
    %v327 = vsub.s32 0, %v326
    %v328 = vrot.slane %v321, %v327
    %v329 = vlaneseq
    %v330 = vshrl.u32 %v329, 7
    %v331 = vsub.s32 1, %v330
    %v332 = vrot.slane %v321, %v331
    %v333 = vlaneseq
    %v334 = vshrl.u32 %v333, 7
    %v335 = vsub.s32 2, %v334
    %v336 = vrot.slane %v321, %v335
    %v337 = vlaneseq
    %v338 = vshrl.u32 %v337, 7
    %v339 = vsub.s32 3, %v338
    %v340 = vrot.slane %v321, %v339
    %v341 = vlaneseq
    %v342 = vshrl.u32 %v341, 7
    %v343 = vsub.s32 4, %v342
    %v344 = vrot.slane %v321, %v343
    %v345 = vlaneseq
    %v346 = vshrl.u32 %v345, 7
    %v347 = vsub.s32 5, %v346
    %v348 = vrot.slane %v321, %v347
    %v349 = vlaneseq
    %v350 = vshrl.u32 %v349, 7
    %v351 = vsub.s32 6, %v350
    %v352 = vrot.slane %v321, %v351
    %v353 = vlaneseq
    %v354 = vshrl.u32 %v353, 7
    %v355 = vsub.s32 7, %v354
    %v356 = vrot.slane %v321, %v355
    %v357 = vlaneseq
    %v358 = vshrl.u32 %v357, 7
    %v359 = vsub.s32 0, %v358
    %v360 = vrot.slane %v322, %v359
    %v361 = vlaneseq
    %v362 = vshrl.u32 %v361, 7
    %v363 = vsub.s32 1, %v362
    %v364 = vrot.slane %v322, %v363
    %v365 = vlaneseq
    %v366 = vshrl.u32 %v365, 7
    %v367 = vsub.s32 2, %v366
    %v368 = vrot.slane %v322, %v367
    %v369 = vlaneseq
    %v370 = vshrl.u32 %v369, 7
    %v371 = vsub.s32 3, %v370
    %v372 = vrot.slane %v322, %v371
    %v373 = vlaneseq
    %v374 = vshrl.u32 %v373, 7
    %v375 = vsub.s32 4, %v374
    %v376 = vrot.slane %v322, %v375
    %v377 = vlaneseq
    %v378 = vshrl.u32 %v377, 7
    %v379 = vsub.s32 5, %v378
    %v380 = vrot.slane %v322, %v379
    %v381 = vlaneseq
    %v382 = vshrl.u32 %v381, 7
    %v383 = vsub.s32 6, %v382
    %v384 = vrot.slane %v322, %v383
    %v385 = vlaneseq
    %v386 = vshrl.u32 %v385, 7
    %v387 = vsub.s32 7, %v386
    %v388 = vrot.slane %v322, %v387
    %v405 = vsel %vm303, %v328, 0.0
    %v406 = vsel %vm304, %v332, 0.0
    %v407 = vsel %vm305, %v336, 0.0
    %v408 = vsel %vm306, %v340, 0.0
    %v409 = vsel %vm307, %v344, 0.0
    %v410 = vsel %vm308, %v348, 0.0
    %v411 = vsel %vm309, %v352, 0.0
    %v412 = vsel %vm310, %v356, 0.0
    %v413 = vsel %vm311, %v360, 0.0
    %v414 = vsel %vm312, %v364, 0.0
    %v415 = vsel %vm313, %v368, 0.0
    %v416 = vsel %vm314, %v372, 0.0
    %v417 = vsel %vm315, %v376, 0.0
    %v418 = vsel %vm316, %v380, 0.0
    %v419 = vsel %vm317, %v384, 0.0
    %v420 = vsel %vm318, %v388, 0.0
    %v437 = vcombine.low %v405, %v406
    %v438 = vcombine.low %v407, %v408
    %v439 = vcombine.low %v409, %v410
    %v440 = vcombine.low %v411, %v412
    %v442 = vunpack.c.l.s4 1966171168
    %v443 = vunpack.c.0.s8 %v442
    %v444 = vlaneseq
    %v445 = vshrl.u32 %v444, 7
    %v446 = vsub.s32 %v443, %v445
    %v447 = vrot.slane %v437, %v446
    %v449 = vunpack.c.l.s4 1966171168
    %v450 = vunpack.c.0.s8 %v449
    %v451 = vlaneseq
    %v452 = vshrl.u32 %v451, 7
    %v453 = vsub.s32 %v450, %v452
    %v454 = vrot.slane %v438, %v453
    %v456 = vunpack.c.l.s4 1966171168
    %v457 = vunpack.c.0.s8 %v456
    %v458 = vlaneseq
    %v459 = vshrl.u32 %v458, 7
    %v460 = vsub.s32 %v457, %v459
    %v461 = vrot.slane %v439, %v460
    %v463 = vunpack.c.l.s4 1966171168
    %v464 = vunpack.c.0.s8 %v463
    %v465 = vlaneseq
    %v466 = vshrl.u32 %v465, 7
    %v467 = vsub.s32 %v464, %v466
    %v468 = vrot.slane %v440, %v467
    %v469 = vcombine.low %v447, %v454
    %v470 = vcombine.low %v461, %v468
    %v472 = vunpack.c.l.s4 1966171168
    %v473 = vunpack.c.0.s8 %v472
    %v474 = vlaneseq
    %v475 = vshrl.u32 %v474, 7
    %v476 = vsub.s32 %v473, %v475
    %v477 = vrot.slane %v469, %v476
    %v479 = vunpack.c.l.s4 1966171168
    %v480 = vunpack.c.0.s8 %v479
    %v481 = vlaneseq
    %v482 = vshrl.u32 %v481, 7
    %v483 = vsub.s32 %v480, %v482
    %v484 = vrot.slane %v470, %v483
    %v485 = vcombine.low %v477, %v484
    %v486 = vcombine.low %v413, %v414
    %v487 = vcombine.low %v415, %v416
    %v488 = vcombine.low %v417, %v418
    %v489 = vcombine.low %v419, %v420
    %v491 = vunpack.c.l.s4 1966171168
    %v492 = vunpack.c.0.s8 %v491
    %v493 = vlaneseq
    %v494 = vshrl.u32 %v493, 7
    %v495 = vsub.s32 %v492, %v494
    %v496 = vrot.slane %v486, %v495
    %v498 = vunpack.c.l.s4 1966171168
    %v499 = vunpack.c.0.s8 %v498
    %v500 = vlaneseq
    %v501 = vshrl.u32 %v500, 7
    %v502 = vsub.s32 %v499, %v501
    %v503 = vrot.slane %v487, %v502
    %v505 = vunpack.c.l.s4 1966171168
    %v506 = vunpack.c.0.s8 %v505
    %v507 = vlaneseq
    %v508 = vshrl.u32 %v507, 7
    %v509 = vsub.s32 %v506, %v508
    %v510 = vrot.slane %v488, %v509
    %v512 = vunpack.c.l.s4 1966171168
    %v513 = vunpack.c.0.s8 %v512
    %v514 = vlaneseq
    %v515 = vshrl.u32 %v514, 7
    %v516 = vsub.s32 %v513, %v515
    %v517 = vrot.slane %v489, %v516
    %v518 = vcombine.low %v496, %v503
    %v519 = vcombine.low %v510, %v517
    %v521 = vunpack.c.l.s4 1966171168
    %v522 = vunpack.c.0.s8 %v521
    %v523 = vlaneseq
    %v524 = vshrl.u32 %v523, 7
    %v525 = vsub.s32 %v522, %v524
    %v526 = vrot.slane %v518, %v525
    %v528 = vunpack.c.l.s4 1966171168
    %v529 = vunpack.c.0.s8 %v528
    %v530 = vlaneseq
    %v531 = vshrl.u32 %v530, 7
    %v532 = vsub.s32 %v529, %v531
    %v533 = vrot.slane %v519, %v532
    %v534 = vcombine.low %v526, %v533
    %537 = vst [vmem:[#allocation7] sm:$0xff] %v485
    %538 = vst [vmem:[#allocation7 + $0x8] sm:$0xff] %v534
    // Predicated region
    $region10: #{tpu_custom_call.1} parent=1 // pred_check
      _
    $region11: #{tpu_custom_call.1} parent=1 // pred_check_branch
      %540 = sbr.rel (0) target = $region13
    $region12: #{tpu_custom_call.1} parent=1 // pred_region
      %s542 = ssub.s32 256, 256
      %543 = vsyncadd [#allocation6], %s542
      %s545 = sshll.u32 [#allocation7], 4
      %s546 = int_to_ptr.vmem [resolvable:$true] %s545
      %548 = dma.vmem_to_hbm [thread:$0]  %s546, 256, %s2, [#allocation6]
    $region13: #{tpu_custom_call.1} parent=1 // pred_fallthru
      _
    // Predicated region
    $region14: #{tpu_custom_call.1} parent=1 // pred_check
      _
    $region15: #{tpu_custom_call.1} parent=1 // pred_check_branch
      %550 = sbr.rel (0) target = $region17
    $region16: #{tpu_custom_call.1} parent=1 // pred_region
      %551 = dma.done [#allocation6], 256
    $region17: #{tpu_custom_call.1} parent=1 // pred_fallthru
      _
    %552 = vsyncpa [#allocation5], 1
    %553 = vsyncpa [#allocation6], 1

</llo_original>
